<compile_context>
chip_gen: v7x
topology: tpu7x:2x2x1
jax: 0.10.0
libtpu: 0.0.40
codegen_flags: <defaults>
</compile_context>

<pallas_src>
import jax
import jax.numpy as jnp
from jax.experimental import pallas as pl
from jax.experimental.pallas import tpu as pltpu


def _round_up(x, m):
    return ((x + m - 1) // m) * m


# ---------------------------------------------------------------------------
# Pass 1: logits tile + unnormalized exp + per-tile softmax stats (single matmul pass).
# ---------------------------------------------------------------------------
def _proj_exp_kernel(x_ref, w_ref, b_ref, unnorm_ref, m_ref, s_ref):
    # x_ref:      (tm, d)      bf16  row tile, resident across the vocab-tile axis
    # w_ref:      (d, tn)      bf16  streamed vocab tile
    # b_ref:      (1, tn)      f32
    # unnorm_ref: (tm, tn)     out dtype -> exp(logits - rowmax_of_this_tile)
    # m_ref:      (tm, n_col)  f32  per-tile row max      (resident, block index (i, 0))
    # s_ref:      (tm, n_col)  f32  per-tile sum of exp   (resident, block index (i, 0))
    j = pl.program_id(1)

    logits = jnp.dot(x_ref[...], w_ref[...],
                     preferred_element_type=jnp.float32) + b_ref[...]
    m_loc = jnp.max(logits, axis=-1, keepdims=True)            # (tm, 1)
    p = jnp.exp(logits - m_loc)                                 # (tm, tn)
    s_loc = jnp.sum(p, axis=-1, keepdims=True)                  # (tm, 1)
    unnorm_ref[...] = p.astype(unnorm_ref.dtype)

    @pl.when(j == 0)
    def _():
        m_ref[...] = jnp.zeros_like(m_ref)
        s_ref[...] = jnp.zeros_like(s_ref)

    # Scatter this tile's stats into column j of the resident stats blocks.
    col = jax.lax.broadcasted_iota(jnp.int32, m_ref.shape, 1)   # (tm, n_col)
    sel = col == j
    m_ref[...] = jnp.where(sel, m_loc, m_ref[...])
    s_ref[...] = jnp.where(sel, s_loc, s_ref[...])


# ---------------------------------------------------------------------------
# Pass 2: in-place rescale:  out = unnorm * exp(m_j - m_final) / l_final  (exact divide).
# ---------------------------------------------------------------------------
def _rescale_kernel(m_ref, s_ref, unnorm_ref, o_ref):
    # m_ref/s_ref: (tm, n_col) f32; unnorm_ref/o_ref: (tm, tn), HBM-aliased buffers.
    j = pl.program_id(1)

    m_all = m_ref[...]
    s_all = s_ref[...]
    m_fin = jnp.max(m_all, axis=-1, keepdims=True)              # (tm, 1) global row max
    corr = jnp.exp(m_all - m_fin)                                # (tm, n_col)
    l_fin = jnp.sum(s_all * corr, axis=-1, keepdims=True)        # (tm, 1) global denom

    col = jax.lax.broadcasted_iota(jnp.int32, m_all.shape, 1)
    corr_j = jnp.sum(jnp.where(col == j, corr, 0.0), axis=-1, keepdims=True)
    scale = corr_j / l_fin                                       # exact normalization
    o_ref[...] = (unnorm_ref[...].astype(jnp.float32) * scale).astype(o_ref.dtype)


def projection_layer(x, weight, bias, *, tm=256, tn=1024, out_dtype=None):
    """softmax(x @ W + b, axis=-1).

    x: (..., d_model); weight: (d_model, vocab); bias: (vocab,).
    Pass `weight` already cast to bf16 to skip the per-call f32->bf16 conversion.
    `out_dtype` lets callers request bf16 probabilities (halves writeback).
    """
    orig_shape = x.shape
    d_model = orig_shape[-1]
    vocab = weight.shape[1]
    out_dtype = jnp.dtype(out_dtype) if out_dtype is not None else jnp.dtype(x.dtype)
    out_bytes = out_dtype.itemsize

    x2d = x.reshape(-1, d_model).astype(jnp.bfloat16)     # bf16 feed to the MXU
    rows = x2d.shape[0]

    # --- generation-aware VMEM budget ---------------------------------------
    try:
        vmem_cap = int(pltpu.get_tpu_info().vmem_capacity_bytes)
    except Exception:
        vmem_cap = 64 << 20
    budget = (100 << 20) if vmem_cap >= (96 << 20) else (48 << 20)

    # --- tile sizing: 16/128 aligned (bf16 sublane packing), shrink to fit ---
    tm = max(16, (tm // 16) * 16)
    tm_e = min(tm, _round_up(rows, 16))
    tn_e = min(max(128, (tn // 128) * 128), _round_up(vocab, 128))

    def _need(tm_, tn_):
        ncol = _round_up(vocab, tn_) // tn_
        return (2 * (tm_ * d_model * 2          # x tile (bf16)
                     + d_model * tn_ * 2        # weight tile (bf16)
                     + tn_ * 4                  # bias tile (f32)
                     + tm_ * tn_ * out_bytes)   # unnormalized output tile
                + 2 * 2 * tm_ * ncol * 4)       # stats blocks

    while _need(tm_e, tn_e) > budget and tn_e > 128:
        tn_e = max(128, tn_e // 2)
    while _need(tm_e, tn_e) > budget and tm_e > 16:
        tm_e = max(16, tm_e // 2)

    rows_p = _round_up(rows, tm_e)
    vocab_p = _round_up(vocab, tn_e)
    n_row = rows_p // tm_e
    n_col = vocab_p // tn_e

    if rows_p != rows:
        x2d = jnp.pad(x2d, ((0, rows_p - rows), (0, 0)))
    # Hoistable: pass a pre-cast bf16 weight to avoid this per-call conversion.
    w = weight if weight.dtype == jnp.bfloat16 else weight.astype(jnp.bfloat16)
    b = bias.astype(jnp.float32)
    if vocab_p != vocab:
        # Zero weights + very negative bias => padded columns get ~0 probability.
        w = jnp.pad(w, ((0, 0), (0, vocab_p - vocab)))
        b = jnp.pad(b, ((0, vocab_p - vocab),), constant_values=jnp.float32(-1e30))
    b2d = b.reshape(1, vocab_p)

    vmem1 = min(max(_need(tm_e, tn_e) + (4 << 20), 16 << 20), budget)
    cost1 = pl.CostEstimate(
        flops=2 * rows_p * d_model * vocab_p,
        transcendentals=rows_p * vocab_p,
        bytes_accessed=(rows_p * d_model * 2
                        + n_row * (d_model * vocab_p * 2 + vocab_p * 4)
                        + rows_p * vocab_p * out_bytes
                        + 2 * rows_p * n_col * 4),
    )

    unnorm, m_tiles, s_tiles = pl.pallas_call(
        _proj_exp_kernel,
        out_shape=(jax.ShapeDtypeStruct((rows_p, vocab_p), out_dtype),
                   jax.ShapeDtypeStruct((rows_p, n_col), jnp.float32),
                   jax.ShapeDtypeStruct((rows_p, n_col), jnp.float32)),
        grid_spec=pltpu.PrefetchScalarGridSpec(
            num_scalar_prefetch=0,
            grid=(n_row, n_col),
            in_specs=[
                pl.BlockSpec((tm_e, d_model), lambda i, j: (i, 0)),   # x (resident)
                pl.BlockSpec((d_model, tn_e), lambda i, j: (0, j)),   # weight tile
                pl.BlockSpec((1, tn_e), lambda i, j: (0, j)),         # bias tile
            ],
            out_specs=[
                pl.BlockSpec((tm_e, tn_e), lambda i, j: (i, j)),      # unnormalized exp
                pl.BlockSpec((tm_e, n_col), lambda i, j: (i, 0)),     # per-tile max
                pl.BlockSpec((tm_e, n_col), lambda i, j: (i, 0)),     # per-tile sum
            ],
        ),
        compiler_params=pltpu.CompilerParams(
            dimension_semantics=("parallel", "arbitrary"),
            vmem_limit_bytes=vmem1,
        ),
        cost_estimate=cost1,
    )(x2d, w, b2d)

    vmem2 = min(max(2 * (2 * tm_e * n_col * 4 + 2 * tm_e * tn_e * out_bytes)
                    + (4 << 20), 16 << 20), budget)
    cost2 = pl.CostEstimate(
        flops=3 * rows_p * vocab_p,
        transcendentals=rows_p * n_col,
        bytes_accessed=2 * rows_p * vocab_p * out_bytes + 2 * rows_p * n_col * 4,
    )

    out = pl.pallas_call(
        _rescale_kernel,
        out_shape=jax.ShapeDtypeStruct((rows_p, vocab_p), out_dtype),
        grid_spec=pltpu.PrefetchScalarGridSpec(
            num_scalar_prefetch=0,
            grid=(n_row, n_col),
            in_specs=[
                pl.BlockSpec((tm_e, n_col), lambda i, j: (i, 0)),
                pl.BlockSpec((tm_e, n_col), lambda i, j: (i, 0)),
                pl.BlockSpec((tm_e, tn_e), lambda i, j: (i, j)),
            ],
            out_specs=pl.BlockSpec((tm_e, tn_e), lambda i, j: (i, j)),
        ),
        compiler_params=pltpu.CompilerParams(
            dimension_semantics=("parallel", "parallel"),
            vmem_limit_bytes=vmem2,
        ),
        cost_estimate=cost2,
        input_output_aliases={2: 0},   # rescale the unnormalized buffer in place
    )(m_tiles, s_tiles, unnorm)

    out = out[:rows, :vocab]
    return out.reshape(*orig_shape[:-1], vocab)


def _reference(x, weight, bias):
    return jax.nn.softmax(
        jnp.einsum("...d,dv->...v", x.astype(jnp.float32),
                   weight.astype(jnp.float32)) + bias, axis=-1)


if __name__ == "__main__":
    key = jax.random.PRNGKey(0)
    k1, k2, k3, k4, k5, k6 = jax.random.split(key, 6)

    # --- Test 1: single-tile path (Linear(d_model=32, vocab=128) + softmax) ---
    batch, seq, d_model, vocab = 2, 8, 32, 128
    x = jax.random.normal(k1, (batch, seq, d_model), dtype=jnp.float32)
    bound = 1.0 / (d_model ** 0.5)
    weight = jax.random.uniform(k2, (d_model, vocab), minval=-bound, maxval=bound,
                                dtype=jnp.float32)
    bias = jax.random.uniform(k3, (vocab,), minval=-bound, maxval=bound,
                              dtype=jnp.float32)

    out = jax.block_until_ready(projection_layer(x, weight, bias))
    ref = _reference(x, weight, bias)
    assert out.shape == (batch, seq, vocab)
    assert jnp.allclose(out, ref, atol=5e-3, rtol=5e-2)
    assert jnp.allclose(jnp.sum(out, axis=-1), 1.0, atol=1e-3)

    # --- Test 2: multi-tile rows + vocab tiling + padding paths ---
    batch2, seq2, d_model2, vocab2 = 2, 20, 32, 200   # rows=40 (pad->48), vocab 200 (pad->256)
    x2 = jax.random.normal(k4, (batch2, seq2, d_model2), dtype=jnp.float32)
    bound2 = 1.0 / (d_model2 ** 0.5)
    w2 = jax.random.uniform(k5, (d_model2, vocab2), minval=-bound2, maxval=bound2,
                            dtype=jnp.float32)
    b2 = jax.random.uniform(k6, (vocab2,), minval=-bound2, maxval=bound2,
                            dtype=jnp.float32)

    out2 = jax.block_until_ready(projection_layer(x2, w2, b2, tm=16, tn=128))
    ref2 = _reference(x2, w2, b2)
    assert out2.shape == (batch2, seq2, vocab2)
    assert jnp.allclose(out2, ref2, atol=5e-3, rtol=5e-2)
    assert jnp.allclose(jnp.sum(out2, axis=-1), 1.0, atol=1e-3)

    print("KERNEL_OK")
</pallas_src>

<mosaic_0001>
module attributes {stable_mosaic.version = 11 : i64} {
  func.func @_proj_exp_kernel(%arg0: i32, %arg1: i32, %arg2: memref<16x32xbf16, #tpu.memory_space<vmem>>, %arg3: memref<32x128xbf16, #tpu.memory_space<vmem>>, %arg4: memref<1x128xf32, #tpu.memory_space<vmem>>, %arg5: memref<16x128xf32, #tpu.memory_space<vmem>>, %arg6: memref<16x1xf32, #tpu.memory_space<vmem>>, %arg7: memref<16x1xf32, #tpu.memory_space<vmem>>) attributes {dimension_semantics = [#tpu.dimension_semantics<parallel>, #tpu.dimension_semantics<arbitrary>], iteration_bounds = array<i64: 1, 1>, scalar_prefetch = 0 : i64, scratch_operands = 0 : i64, tpu.core_type = #tpu.core_type<tc>, window_params = [{transform_indices = @transform_0, window_bounds = array<i64: 16, 32>}, {transform_indices = @transform_1, window_bounds = array<i64: 32, 128>}, {transform_indices = @transform_2, window_bounds = array<i64: 1, 128>}, {transform_indices = @transform_3, window_bounds = array<i64: 16, 128>}, {transform_indices = @transform_4, window_bounds = array<i64: 16, 1>}, {transform_indices = @transform_5, window_bounds = array<i64: 16, 1>}]} {
    %c0 = arith.constant 0 : index
    %c0_0 = arith.constant 0 : index
    %0 = vector.load %arg2[%c0, %c0_0] : memref<16x32xbf16, #tpu.memory_space<vmem>>, vector<16x32xbf16>
    %c0_1 = arith.constant 0 : index
    %c0_2 = arith.constant 0 : index
    %1 = vector.load %arg3[%c0_1, %c0_2] : memref<32x128xbf16, #tpu.memory_space<vmem>>, vector<32x128xbf16>
    %cst = arith.constant dense<0.000000e+00> : vector<16x128xf32>
    %2 = tpu.matmul %0, %1, %cst {dimension_numbers = #tpu.dot_dimension_numbers<[1], [0], [0], [1], [0, 0, 1, 1], [], []>} : vector<16x32xbf16>, vector<32x128xbf16>, vector<16x128xf32> -> vector<16x128xf32>
    %c0_3 = arith.constant 0 : index
    %c0_4 = arith.constant 0 : index
    %3 = vector.load %arg4[%c0_3, %c0_4] : memref<1x128xf32, #tpu.memory_space<vmem>>, vector<1x128xf32>
    %4 = vector.broadcast %3 : vector<1x128xf32> to vector<16x128xf32>
    %5 = arith.addf %2, %4 : vector<16x128xf32>
    %cst_5 = arith.constant dense<0xFF800000> : vector<16xf32>
    %6 = vector.multi_reduction <maximumf>, %5, %cst_5 [1] : vector<16x128xf32> to vector<16xf32>
    %7 = vector.shape_cast %6 : vector<16xf32> to vector<16x1xf32>
    %8 = vector.broadcast %7 : vector<16x1xf32> to vector<16x128xf32>
    %9 = arith.subf %5, %8 : vector<16x128xf32>
    %10 = math.exp %9 : vector<16x128xf32>
    %cst_6 = arith.constant dense<0.000000e+00> : vector<16xf32>
    %11 = vector.multi_reduction <add>, %10, %cst_6 [1] : vector<16x128xf32> to vector<16xf32>
    %12 = vector.shape_cast %11 : vector<16xf32> to vector<16x1xf32>
    %c0_7 = arith.constant 0 : index
    %c0_8 = arith.constant 0 : index
    %13 = vector.load %arg5[%c0_7, %c0_8] : memref<16x128xf32, #tpu.memory_space<vmem>>, vector<16x128xf32>
    tpu.vector_store %arg5[%c0_7, %c0_8], %10 {strides = array<i32>} : memref<16x128xf32, #tpu.memory_space<vmem>>, vector<16x128xf32>,
    %c0_i32 = arith.constant 0 : i32
    %14 = arith.cmpi eq, %arg1, %c0_i32 : i32
    %15 = arith.extui %14 : i1 to i32
    %c0_i32_9 = arith.constant 0 : i32
    %16 = arith.cmpi ne, %15, %c0_i32_9 : i32
    scf.if %16 {
      %cst_18 = arith.constant 0.000000e+00 : f32
      %26 = vector.broadcast %cst_18 : f32 to vector<16x1xf32>
      %c0_19 = arith.constant 0 : index
      %c0_20 = arith.constant 0 : index
      %27 = vector.load %arg6[%c0_19, %c0_20] : memref<16x1xf32, #tpu.memory_space<vmem>>, vector<16x1xf32>
      tpu.vector_store %arg6[%c0_19, %c0_20], %26 {strides = array<i32>} : memref<16x1xf32, #tpu.memory_space<vmem>>, vector<16x1xf32>,
      %cst_21 = arith.constant 0.000000e+00 : f32
      %28 = vector.broadcast %cst_21 : f32 to vector<16x1xf32>
      %c0_22 = arith.constant 0 : index
      %c0_23 = arith.constant 0 : index
      %29 = vector.load %arg7[%c0_22, %c0_23] : memref<16x1xf32, #tpu.memory_space<vmem>>, vector<16x1xf32>
      tpu.vector_store %arg7[%c0_22, %c0_23], %28 {strides = array<i32>} : memref<16x1xf32, #tpu.memory_space<vmem>>, vector<16x1xf32>,
    } else {
    }
    %17 = tpu.iota {dimensions = array<i32: 1>} : vector<16x1xi32>
    %18 = vector.broadcast %arg1 : i32 to vector<16x1xi32>
    %19 = arith.cmpi eq, %17, %18 : vector<16x1xi32>
    %c0_10 = arith.constant 0 : index
    %c0_11 = arith.constant 0 : index
    %20 = vector.load %arg6[%c0_10, %c0_11] : memref<16x1xf32, #tpu.memory_space<vmem>>, vector<16x1xf32>
    %21 = arith.select %19, %7, %20 : vector<16x1xi1>, vector<16x1xf32>
    %c0_12 = arith.constant 0 : index
    %c0_13 = arith.constant 0 : index
    %22 = vector.load %arg6[%c0_12, %c0_13] : memref<16x1xf32, #tpu.memory_space<vmem>>, vector<16x1xf32>
    tpu.vector_store %arg6[%c0_12, %c0_13], %21 {strides = array<i32>} : memref<16x1xf32, #tpu.memory_space<vmem>>, vector<16x1xf32>,
    %c0_14 = arith.constant 0 : index
    %c0_15 = arith.constant 0 : index
    %23 = vector.load %arg7[%c0_14, %c0_15] : memref<16x1xf32, #tpu.memory_space<vmem>>, vector<16x1xf32>
    %24 = arith.select %19, %12, %23 : vector<16x1xi1>, vector<16x1xf32>
    %c0_16 = arith.constant 0 : index
    %c0_17 = arith.constant 0 : index
    %25 = vector.load %arg7[%c0_16, %c0_17] : memref<16x1xf32, #tpu.memory_space<vmem>>, vector<16x1xf32>
    tpu.vector_store %arg7[%c0_16, %c0_17], %24 {strides = array<i32>} : memref<16x1xf32, #tpu.memory_space<vmem>>, vector<16x1xf32>,
    return
  }
  func.func @transform_0(%arg0: i32, %arg1: i32) -> (i32, i32) {
    %c0_i32 = arith.constant 0 : i32
    %c0_i32_0 = arith.constant 0 : i32
    return %arg0, %c0_i32 : i32, i32
  }
  func.func @transform_1(%arg0: i32, %arg1: i32) -> (i32, i32) {
    %c0_i32 = arith.constant 0 : i32
    %c0_i32_0 = arith.constant 0 : i32
    return %c0_i32, %arg1 : i32, i32
  }
  func.func @transform_2(%arg0: i32, %arg1: i32) -> (i32, i32) {
    %c0_i32 = arith.constant 0 : i32
    %c0_i32_0 = arith.constant 0 : i32
    return %c0_i32, %arg1 : i32, i32
  }
  func.func @transform_3(%arg0: i32, %arg1: i32) -> (i32, i32) {
    %c0_i32 = arith.constant 0 : i32
    return %arg0, %arg1 : i32, i32
  }
  func.func @transform_4(%arg0: i32, %arg1: i32) -> (i32, i32) {
    %c0_i32 = arith.constant 0 : i32
    %c0_i32_0 = arith.constant 0 : i32
    return %arg0, %c0_i32 : i32, i32
  }
  func.func @transform_5(%arg0: i32, %arg1: i32) -> (i32, i32) {
    %c0_i32 = arith.constant 0 : i32
    %c0_i32_0 = arith.constant 0 : i32
    return %arg0, %c0_i32 : i32, i32
  }
}

</mosaic_0001>

<llo_original>
// kernel: tpu_custom_call.1
$region0: #{tpu_custom_call.1}
  #allocation0 [shape = 'u32[]', space=smem, size = 0x4, offset = 0x4, fixed_abs, tag = 'smem constant byte address 0x4 - core index']
  #allocation1 [shape = 'u32[144,128]{1,0:T(1,128)}', space=vmem, size = 0x12000, scoped, tag = 'internal scratch']
  %s0 = inlined_call_operand.hbm [shape: bf16[16,32], index: 0, kind: input, shape index: {}]
  %s1 = inlined_call_operand.hbm [shape: bf16[32,128], index: 1, kind: input, shape index: {}]
  %s2 = inlined_call_operand.vmem [shape: f32[1,128], index: 2, kind: input, shape index: {}]
  %s3 = inlined_call_operand.hbm [shape: f32[16,128], index: 3, kind: output, shape index: {0}]
  %s4 = inlined_call_operand.vmem [shape: f32[16,1], index: 4, kind: output, shape index: {1}]
  %s5 = inlined_call_operand.vmem [shape: f32[16,1], index: 5, kind: output, shape index: {2}]
  %6 = xla_tuple %s3, %s4, %s5
  %s7 = sld [smem:[#allocation0]]
  $region50: #{tpu_custom_call.1} parent=0
    _
  %s9 = ssub.s32 1, %s7
  %s10 = scalar_select 0, %s9, %s7
  $region1: #{tpu_custom_call.1} parent=0
    #allocation2 [shape = 'u8[4096]{0}', space=vmem, size = 0x1000, scoped, tag = 'input window, operand 0, single buffered']
    #allocation3 [shape = 's32[1]{0}', space=sflag, size = 0x4, scoped, tag = 'scoped memory for tpu_custom_call.1']
    #allocation4 [shape = 's32[1]{0}', space=sflag, size = 0x4, scoped, tag = 'scoped memory for tpu_custom_call.1']
    #allocation5 [shape = 'u8[8192]{0}', space=vmem, size = 0x2000, scoped, tag = 'input window, operand 1, single buffered']
    #allocation6 [shape = 's32[1]{0}', space=sflag, size = 0x4, scoped, tag = 'scoped memory for tpu_custom_call.1']
    #allocation7 [shape = 'u8[8192]{0}', space=vmem, size = 0x2000, scoped, tag = 'output window, operand 0, single buffered']
    %11 = vsyncpa [#allocation3], 0
    %12 = vsyncpa [#allocation6], 0
    %13 = vsyncpa [#allocation4], 0
    // Predicated region
    $region2: #{tpu_custom_call.1} parent=1 // pred_check
      _
    $region3: #{tpu_custom_call.1} parent=1 // pred_check_branch
      %15 = sbr.rel (0) target = $region5
    $region4: #{tpu_custom_call.1} parent=1 // pred_region
      %s17 = ssub.s32 128, 128
      %18 = vsyncadd [#allocation3], %s17
      %s19 = sshll.u32 [#allocation2], 4
      %s20 = int_to_ptr.vmem [resolvable:$true] %s19
      %25 = dma.hbm_to_vmem [thread:$0]  %s0, 128, %s20, [#allocation3], 64, 64, 4
    $region5: #{tpu_custom_call.1} parent=1 // pred_fallthru
      _
    // Predicated region
    $region6: #{tpu_custom_call.1} parent=1 // pred_check
      _
    $region7: #{tpu_custom_call.1} parent=1 // pred_check_branch
      %27 = sbr.rel (0) target = $region9
    $region8: #{tpu_custom_call.1} parent=1 // pred_region
      %s29 = ssub.s32 256, 256
      %30 = vsyncadd [#allocation6], %s29
      %s31 = sshll.u32 [#allocation5], 4
      %s32 = int_to_ptr.vmem [resolvable:$true] %s31
      %37 = dma.hbm_to_vmem [thread:$0]  %s1, 256, %s32, [#allocation6], 64, 64, 4
    $region9: #{tpu_custom_call.1} parent=1 // pred_fallthru
      _
    // Predicated region
    $region10: #{tpu_custom_call.1} parent=1 // pred_check
      _
    $region11: #{tpu_custom_call.1} parent=1 // pred_check_branch
      %39 = sbr.rel (0) target = $region13
    $region12: #{tpu_custom_call.1} parent=1 // pred_region
      _
    $region13: #{tpu_custom_call.1} parent=1 // pred_fallthru
      _
    // Predicated region
    $region14: #{tpu_custom_call.1} parent=1 // pred_check
      _
    $region15: #{tpu_custom_call.1} parent=1 // pred_check_branch
      %41 = sbr.rel (0) target = $region17
    $region16: #{tpu_custom_call.1} parent=1 // pred_region
      %42 = dma.done [#allocation3], 128
    $region17: #{tpu_custom_call.1} parent=1 // pred_fallthru
      _
    // Predicated region
    $region18: #{tpu_custom_call.1} parent=1 // pred_check
      _
    $region19: #{tpu_custom_call.1} parent=1 // pred_check_branch
      %44 = sbr.rel (0) target = $region21
    $region20: #{tpu_custom_call.1} parent=1 // pred_region
      %45 = dma.done [#allocation6], 256
    $region21: #{tpu_custom_call.1} parent=1 // pred_fallthru
      _
    %v47 = vld [vmem:[#allocation2] sm:$0xf]
    %v48 = vld [vmem:[#allocation2 + $0x4] sm:$0xf]
    %v49 = vld [vmem:[#allocation5] sm:$0xf]
    %v50 = vld [vmem:[#allocation5 + $0x4] sm:$0xf]
    %v51 = vld [vmem:[#allocation5 + $0x8] sm:$0xf]
    %v52 = vld [vmem:[#allocation5 + $0xc] sm:$0xf]
    %v53 = vld [vmem:[%s2] sm:$0x1]
    %v55 = vlaneseq
    %v56 = vshrl.u32 %v55, 7
    %v57 = vsub.s32 0, %v56
    %v58 = vrot.slane %v53, %v57
    %v62 = vunpack.c.l.b16 %v47
    %v63 = vunpack.c.l.b16 %v48
    %v64 = vpack.c.b16 %v63, %v62
    %v69 = vunpack.c.l.b16 %v49
    %v70 = vunpack.c.l.b16 %v50
    %v71 = vunpack.c.l.b16 %v51
    %v72 = vunpack.c.l.b16 %v52
    %v73 = vpack.c.b16 %v70, %v69
    %v74 = vpack.c.b16 %v72, %v71
    %vm77 = vcmask 261120
    %v79 = vsel %vm77, %v64, 0
    %81 = vmatprep.subr.bf16.mxu0 0
    %82 = vmatpush1.bf16.msra.mxu0 %v73
    %83 = vmatprep.subr.bf16.mxu0 0
    %84 = vmatpush1.bf16.msra.mxu0 %v74
    %85 = vmatprep.subr.bf16.mxu0 0
    %86 = vmatpush1.bf16.msra.mxu0 0
    %87 = vmatprep.subr.bf16.mxu0 0
    %88 = vmatpush1.bf16.msra.mxu0 0
    %89 = vmatprep.subr.bf16.mxu0 0
    %90 = vmatpush1.bf16.msra.mxu0 0
    %91 = vmatprep.subr.bf16.mxu0 0
    %92 = vmatpush1.bf16.msra.mxu0 0
    %93 = vmatprep.subr.bf16.mxu0 0
    %94 = vmatpush1.bf16.msra.mxu0 0
    %95 = vmatprep.subr.bf16.mxu0 0
    %96 = vmatpush1.bf16.msra.mxu0 0
    %97 = vmatprep.subr.bf16.mxu0 0
    %98 = vmatpush1.bf16.msra.mxu0 0
    %99 = vmatprep.subr.bf16.mxu0 0
    %100 = vmatpush1.bf16.msra.mxu0 0
    %101 = vmatprep.subr.bf16.mxu0 0
    %102 = vmatpush1.bf16.msra.mxu0 0
    %103 = vmatprep.subr.bf16.mxu0 0
    %104 = vmatpush1.bf16.msra.mxu0 0
    %105 = vmatprep.subr.bf16.mxu0 0
    %106 = vmatpush1.bf16.msra.mxu0 0
    %107 = vmatprep.subr.bf16.mxu0 0
    %108 = vmatpush1.bf16.msra.mxu0 0
    %109 = vmatprep.subr.bf16.mxu0 0
    %110 = vmatpush1.bf16.msra.mxu0 0
    %111 = vmatprep.subr.bf16.mxu0 0
    %112 = vmatpush1.bf16.msra.mxu0 0
    %113 = vmatprep.mubr.bf16.mxu0 0
    %114 = vmatmul.mubr.bf16.gmra.mrb[0].mxu0 %v79
    %v115 = vpop.f32.mrb[0].mxu0
    %v116 = vadd.f32 %v58, %v115
    %v117 = vpop.f32.mrb[0].mxu0
    %v118 = vpop.f32.mrb[0].mxu0
    %v119 = vadd.f32 %v58, %v118
    %v120 = vpop.f32.mrb[0].mxu0
    %121 = vdwg.mxu0
    %122 = vmax.xlane.f32.xlu0 %v116
    %v123 = vpop.xlane.xlu0 %122
    %124 = vmax.xlane.f32.xlu0 %v119
    %v125 = vpop.xlane.xlu0 %124
    %v126 = vsub.f32 %v116, %v123
    %v127 = vsub.f32 %v119, %v125
    %v128 = vmul.f32 %v126, 1.442695
    %v129 = vpow.pop %v128
    %v130 = vmul.f32 %v127, 1.442695
    %v131 = vpow.pop %v130
    %132 = vadd.xlane.f32.xlu0 %v129
    %v133 = vpop.xlane.xlu0 %132
    %134 = vadd.xlane.f32.xlu0 %v131
    %v135 = vpop.xlane.xlu0 %134
    %136 = vst [vmem:[#allocation7] sm:$0xff] %v129
    %137 = vst [vmem:[#allocation7 + $0x8] sm:$0xff] %v131
    %p138 = scmp.eq.s32.totalorder 0, 0
    // Predicated region
    $region22: #{tpu_custom_call.1} parent=1 // pred_check
      %p139 = pneg %p138
    $region23: #{tpu_custom_call.1} parent=1 // pred_check_branch
      %141 = sbr.rel (%p139) target = $region25
    $region24: #{tpu_custom_call.1} parent=1 // pred_region
      %vm142 = vcmask 7168
      %143 = vst.msk [vmem:[%s4] sm:$0xff] %vm142, 0.0
      %144 = vst.msk [vmem:[%s4 + $0x8] sm:$0xff] %vm142, 0.0
      %145 = vst.msk [vmem:[%s5] sm:$0xff] %vm142, 0.0
      %146 = vst.msk [vmem:[%s5 + $0x8] sm:$0xff] %vm142, 0.0
    $region25: #{tpu_custom_call.1} parent=1 // pred_fallthru
      _
    %v147 = vlaneseq
    %v148 = vand.u32 %v147, 127
    %v149 = vstv 0
    %vm150 = vcmp.eq.s32.totalorder %v148, %v149
    %v151 = vld [vmem:[%s4] sm:$0xff]
    %v152 = vld [vmem:[%s4 + $0x8] sm:$0xff]
    %v153 = vsel %vm150, %v123, %v151
    %v154 = vsel %vm150, %v125, %v152
    %vm155 = vcmask 7168
    %156 = vst.msk [vmem:[%s4] sm:$0xff] %vm155, %v153
    %157 = vst.msk [vmem:[%s4 + $0x8] sm:$0xff] %vm155, %v154
    %v158 = vld [vmem:[%s5] sm:$0xff]
    %v159 = vld [vmem:[%s5 + $0x8] sm:$0xff]
    %v160 = vsel %vm150, %v133, %v158
    %v161 = vsel %vm150, %v135, %v159
    %162 = vst.msk [vmem:[%s5] sm:$0xff] %vm155, %v160
    %163 = vst.msk [vmem:[%s5 + $0x8] sm:$0xff] %vm155, %v161
    // Predicated region
    $region26: #{tpu_custom_call.1} parent=1 // pred_check
      _
    $region27: #{tpu_custom_call.1} parent=1 // pred_check_branch
      %165 = sbr.rel (0) target = $region29
    $region28: #{tpu_custom_call.1} parent=1 // pred_region
      %s167 = ssub.s32 256, 256
      %168 = vsyncadd [#allocation4], %s167
      %s169 = sshll.u32 [#allocation7], 4
      %s170 = int_to_ptr.vmem [resolvable:$true] %s169
      %175 = dma.vmem_to_hbm [thread:$0]  %s170, 256, %s3, [#allocation4], 128, 128, 8
    $region29: #{tpu_custom_call.1} parent=1 // pred_fallthru
      _
    // Predicated region
    $region30: #{tpu_custom_call.1} parent=1 // pred_check
      _
    $region31: #{tpu_custom_call.1} parent=1 // pred_check_branch
      %177 = sbr.rel (0) target = $region33
    $region32: #{tpu_custom_call.1} parent=1 // pred_region
      _
    $region33: #{tpu_custom_call.1} parent=1 // pred_fallthru
      _
    // Predicated region
    $region34: #{tpu_custom_call.1} parent=1 // pred_check
      _
    $region35: #{tpu_custom_call.1} parent=1 // pred_check_branch
      %179 = sbr.rel (0) target = $region37
    $region36: #{tpu_custom_call.1} parent=1 // pred_region
      _
    $region37: #{tpu_custom_call.1} parent=1 // pred_fallthru
      _
    // Predicated region
    $region38: #{tpu_custom_call.1} parent=1 // pred_check
      _
    $region39: #{tpu_custom_call.1} parent=1 // pred_check_branch
      %181 = sbr.rel (0) target = $region41
    $region40: #{tpu_custom_call.1} parent=1 // pred_region
      %182 = dma.done [#allocation4], 256
    $region41: #{tpu_custom_call.1} parent=1 // pred_fallthru
      _
    // Predicated region
    $region42: #{tpu_custom_call.1} parent=1 // pred_check
      _
    $region43: #{tpu_custom_call.1} parent=1 // pred_check_branch
      %184 = sbr.rel (0) target = $region45
    $region44: #{tpu_custom_call.1} parent=1 // pred_region
      _
    $region45: #{tpu_custom_call.1} parent=1 // pred_fallthru
      _
    // Predicated region
    $region46: #{tpu_custom_call.1} parent=1 // pred_check
      _
    $region47: #{tpu_custom_call.1} parent=1 // pred_check_branch
      %186 = sbr.rel (0) target = $region49
    $region48: #{tpu_custom_call.1} parent=1 // pred_region
      _
    $region49: #{tpu_custom_call.1} parent=1 // pred_fallthru
      _
    %187 = vsyncpa [#allocation3], 1
    %188 = vsyncpa [#allocation6], 1
    %189 = vsyncpa [#allocation4], 1

</llo_original>
